<compile_context>
chip_gen: v6e
topology: v6e:2x2x1
jax: 0.10.0
libtpu: 0.0.40
codegen_flags: <defaults>
</compile_context>

<pallas_src>
import jax
import jax.numpy as jnp
from jax import lax
from jax.experimental import pallas as pl
from jax.experimental.pallas import tpu as pltpu


def _vmem_capacity_bytes():
    """Physical VMEM per TensorCore; conservative (v7x) fallback if unknown."""
    try:
        info = pltpu.get_tpu_info()
        cap = getattr(info, "vmem_capacity_bytes", None)
        if cap:
            return int(cap)
    except Exception:
        pass
    return 64 * 1024 * 1024


def _largest_aligned_divisor(n, cap, align):
    """Largest d <= cap with d % align == 0 and n % d == 0, else None."""
    d = (min(n, cap) // align) * align
    while d >= align:
        if n % d == 0:
            return d
        d -= align
    return None


def _pick_tiles_2d(rows, cols, elem_bytes, budget, row_align, min_row_tiles=1):
    """Pick (row_tile, col_tile) for a (rows, cols) array under a byte budget.

    Column tile is a multiple of 128 dividing cols (else the full width, which
    is always a legal block dim).  Row tile is a multiple of `row_align`
    dividing rows (else all rows).  `min_row_tiles` caps the row tile so the
    row grid axis has at least that many parallel steps when possible.
    """
    cap_cols = max(128, budget // (row_align * elem_bytes))
    tl = _largest_aligned_divisor(cols, cap_cols, 128) or cols
    cap_rows = max(row_align, budget // max(1, tl * elem_bytes))
    if min_row_tiles > 1 and rows >= min_row_tiles * row_align:
        cap_rows = min(cap_rows,
                       max(row_align,
                           ((rows // min_row_tiles) // row_align) * row_align))
    tr = _largest_aligned_divisor(rows, cap_rows, row_align) or rows
    return tr, tl


def _make_stats_kernel(tr, tl, pw, accumulate):
    """Per-row partial sum / sum-of-squares over a (tr, tl) block.

    When pw == 128 the block is consumed in 128-wide lane-aligned column
    chunks and accumulated with VPU adds only (no cross-lane XLU reduce, no
    masked stores); the final lane reduce happens in the JAX finalize.
    """
    lane_dense = (pw == 128)
    nk = (tl // pw) if lane_dense else 1

    def chunk_sums(x_ref):
        if lane_dense:
            if nk <= 8:                       # short: fully unrolled (static)
                c0 = x_ref[:, 0:pw].astype(jnp.float32)
                s, ss = c0, c0 * c0
                for k in range(1, nk):
                    c = x_ref[:, k * pw:(k + 1) * pw].astype(jnp.float32)
                    s = s + c
                    ss = ss + c * c
            else:                             # long: fori_loop over chunks
                def body(k, carry):
                    s, ss = carry
                    off = pl.multiple_of(k * pw, pw)
                    c = x_ref[:, pl.ds(off, pw)].astype(jnp.float32)
                    return s + c, ss + c * c
                z = jnp.zeros((tr, pw), jnp.float32)
                s, ss = lax.fori_loop(0, nk, body, (z, z))
            return s, ss
        # Fallback (L not a multiple of 128): plain lane reduce per block.
        x = x_ref[...].astype(jnp.float32)
        return (jnp.sum(x, axis=1, keepdims=True),
                jnp.sum(x * x, axis=1, keepdims=True))

    if accumulate:
        def kernel(x_ref, sum_ref, sumsq_ref):
            @pl.when(pl.program_id(1) == 0)
            def _():
                sum_ref[...] = jnp.zeros_like(sum_ref)
                sumsq_ref[...] = jnp.zeros_like(sumsq_ref)
            s, ss = chunk_sums(x_ref)
            sum_ref[...] += s
            sumsq_ref[...] += ss
    else:
        def kernel(x_ref, sum_ref, sumsq_ref):
            s, ss = chunk_sums(x_ref)
            sum_ref[...] = s
            sumsq_ref[...] = ss
    return kernel


def _apply_kernel(x_ref, scale_ref, shift_ref, o_ref):
    """y = x * scale + shift with per-row (per-channel) scale/shift folded."""
    x = x_ref[...].astype(jnp.float32)                       # (tr, tl)
    o_ref[...] = (x * scale_ref[...] + shift_ref[...]).astype(o_ref.dtype)


def _make_fused_kernel(r_count, denom, eps):
    """Whole-array fused BN: x resident in VMEM, two-pass centered variance."""
    inv_r = 1.0 / float(r_count)
    inv_d = 1.0 / float(denom)

    def kernel(x_ref, w_ref, b_ref, o_ref, mean_ref, var_ref):
        x = x_ref[...].astype(jnp.float32)                   # (N, C, L)
        s = jnp.sum(jnp.sum(x, axis=2, keepdims=True), axis=0, keepdims=True)
        mean = s * inv_r                                     # (1, C, 1)
        xc = x - mean
        ss = jnp.sum(jnp.sum(xc * xc, axis=2, keepdims=True),
                     axis=0, keepdims=True)
        var = ss * inv_d                                     # unbiased (spec)
        inv_std = lax.rsqrt(var + eps)
        scale = w_ref[...] * inv_std
        shift = b_ref[...] - mean * scale
        o_ref[...] = (x * scale + shift).astype(o_ref.dtype)
        mean_ref[...] = mean
        var_ref[...] = var
    return kernel


def batchnorm2d(x, weight, bias, running_mean, running_var,
                eps=1e-5, momentum=0.1, force_tiled=False):
    """x: (N, C, H, W). Returns (out, new_running_mean, new_running_var)."""
    N, C, H, W = x.shape
    L = H * W
    NC = N * C
    R = N * L
    denom = float(R - 1) if R > 1 else 1.0                   # static R==1 guard

    elem_bytes = jnp.dtype(x.dtype).itemsize
    row_align = max(8, 32 // elem_bytes)                     # 8 f32, 16 bf16, 32 i8

    vmem_cap = _vmem_capacity_bytes()                        # 128 MiB v5e/v6e, 64 MiB v7x
    vmem_limit = (vmem_cap * 3) // 4

    w = (jnp.ones((C,), jnp.float32) if weight is None
         else weight.reshape(C).astype(jnp.float32))
    b = (jnp.zeros((C,), jnp.float32) if bias is None
         else bias.reshape(C).astype(jnp.float32))

    # ---------------- fused VMEM-resident fast path ----------------
    x_f32_bytes = 4 * NC * L
    use_fused = (not force_tiled) and (x_f32_bytes <= vmem_limit // 6)

    if use_fused:
        x3 = x.reshape(N, C, L)                              # free reshape
        out3, mean1, var1 = pl.pallas_call(
            _make_fused_kernel(R, denom, eps),
            out_shape=(
                jax.ShapeDtypeStruct((N, C, L), x.dtype),
                jax.ShapeDtypeStruct((1, C, 1), jnp.float32),
                jax.ShapeDtypeStruct((1, C, 1), jnp.float32),
            ),
            compiler_params=pltpu.CompilerParams(vmem_limit_bytes=vmem_limit),
        )(x3, w.reshape(1, C, 1), b.reshape(1, C, 1))
        out = out3.reshape(N, C, H, W)
        mean = mean1.reshape(C)
        var = var1.reshape(C)
    else:
        # ---------------- tiled two-sweep path ----------------
        x2 = x.reshape(NC, L)                                # free reshape

        # ----- pass 1: per-row partial sums / sums of squares -----
        budget1 = max(1 << 20, vmem_cap // 8)                # tiny outputs -> big blocks
        tr1, tl1 = _pick_tiles_2d(NC, L, elem_bytes, budget1, row_align,
                                  min_row_tiles=2)
        nr1, nl1 = NC // tr1, L // tl1
        lane_dense = (tl1 % 128 == 0)
        pw = 128 if lane_dense else 1
        # If the row axis cannot be split (NC too small), emit disjoint per-L-tile
        # partials so both grid axes are "parallel" (megacore on v7x).
        l_parallel = lane_dense and (nr1 < 2)
        out_w = (nl1 * pw) if l_parallel else pw
        out_idx = (lambda r, l: (r, l)) if l_parallel else (lambda r, l: (r, 0))
        semantics1 = (("parallel", "parallel") if l_parallel
                      else ("parallel", "arbitrary"))

        sums, sumsqs = pl.pallas_call(
            _make_stats_kernel(tr1, tl1, pw, accumulate=not l_parallel),
            out_shape=(
                jax.ShapeDtypeStruct((NC, out_w), jnp.float32),
                jax.ShapeDtypeStruct((NC, out_w), jnp.float32),
            ),
            grid=(nr1, nl1),
            in_specs=[pl.BlockSpec((tr1, tl1), lambda r, l: (r, l))],
            out_specs=(
                pl.BlockSpec((tr1, pw), out_idx),
                pl.BlockSpec((tr1, pw), out_idx),
            ),
            compiler_params=pltpu.CompilerParams(
                dimension_semantics=semantics1,
                vmem_limit_bytes=vmem_limit),
        )(x2)

        # ----- tiny per-channel finalize (plain JAX, C-sized) -----
        sum_c = sums.reshape(N, C, -1).sum(axis=(0, 2))
        sumsq_c = sumsqs.reshape(N, C, -1).sum(axis=(0, 2))
        mean = sum_c * (1.0 / R)
        # NOTE: single-sweep E[x^2]-E[x]^2 in f32; clamp guards fp cancellation.
        var = jnp.maximum((sumsq_c - R * mean * mean) * (1.0 / denom), 0.0)

        inv_std = lax.rsqrt(var + eps)
        scale = w * inv_std
        shift = b - mean * scale
        scale_rows = jnp.broadcast_to(scale[None, :], (N, C)).reshape(NC, 1)
        shift_rows = jnp.broadcast_to(shift[None, :], (N, C)).reshape(NC, 1)

        # ----- pass 2: y = x * scale + shift (fully parallel grid) -----
        budget2 = max(1 << 20, vmem_cap // 16)               # 2x(in+out) double-buffered
        tr2, tl2 = _pick_tiles_2d(NC, L, elem_bytes, budget2, row_align)
        out2 = pl.pallas_call(
            _apply_kernel,
            out_shape=jax.ShapeDtypeStruct((NC, L), x.dtype),
            grid=(NC // tr2, L // tl2),
            in_specs=[
                pl.BlockSpec((tr2, tl2), lambda r, l: (r, l)),
                pl.BlockSpec((tr2, 1), lambda r, l: (r, 0)),
                pl.BlockSpec((tr2, 1), lambda r, l: (r, 0)),
            ],
            out_specs=pl.BlockSpec((tr2, tl2), lambda r, l: (r, l)),
            compiler_params=pltpu.CompilerParams(
                dimension_semantics=("parallel", "parallel"),
                vmem_limit_bytes=vmem_limit),
        )(x2, scale_rows, shift_rows)
        out = out2.reshape(N, C, H, W)

    # running-stat update (plain JAX glue; mirrors the module side effects)
    rm = running_mean.reshape(C).astype(jnp.float32)
    rv = running_var.reshape(C).astype(jnp.float32)
    new_rm = momentum * mean + (1.0 - momentum) * rm
    new_rv = momentum * var + (1.0 - momentum) * rv
    return out, new_rm, new_rv


if __name__ == "__main__":
    key = jax.random.PRNGKey(0)

    def reference(x, w, b, rm, rv, eps, momentum):
        N, C, H, W = x.shape
        R = N * H * W
        mean = jnp.mean(x, axis=(0, 2, 3))
        var = jnp.sum((x - mean[None, :, None, None]) ** 2,
                      axis=(0, 2, 3)) / float(max(R - 1, 1))
        out = (x - mean[None, :, None, None]) * lax.rsqrt(
            var[None, :, None, None] + eps)
        out = out * w.reshape(1, C, 1, 1) + b.reshape(1, C, 1, 1)
        new_rm = momentum * mean + (1.0 - momentum) * rm
        new_rv = momentum * var + (1.0 - momentum) * rv
        return out, new_rm, new_rv

    def check(N, C, H, W, force_tiled, tag):
        k = jax.random.fold_in(key, N * 1000003 + C * 1009 + H * 31 + W)
        x = jax.random.normal(k, (N, C, H, W), dtype=jnp.float32)
        w = jnp.linspace(0.5, 1.5, C).astype(jnp.float32)      # gamma
        b = jnp.linspace(-0.3, 0.3, C).astype(jnp.float32)     # beta
        rm = jnp.zeros((C,), jnp.float32)
        rv = jnp.ones((C,), jnp.float32)

        out, nrm, nrv = batchnorm2d(x, w, b, rm, rv, eps=1e-5, momentum=0.1,
                                    force_tiled=force_tiled)
        jax.block_until_ready((out, nrm, nrv))
        ro, rrm, rrv = reference(x, w, b, rm, rv, 1e-5, 0.1)
        assert jnp.allclose(out, ro, atol=1e-4, rtol=1e-4), f"out mismatch [{tag}]"
        assert jnp.allclose(nrm, rrm, atol=1e-5, rtol=1e-5), f"rm mismatch [{tag}]"
        assert jnp.allclose(nrv, rrv, atol=1e-4, rtol=1e-4), f"rv mismatch [{tag}]"

    # fused VMEM-resident fast path (the primary small shape)
    check(2, 4, 16, 16, force_tiled=False, tag="fused")
    # tiled two-sweep path, short static chunk loop
    check(2, 4, 16, 16, force_tiled=True, tag="tiled-small")
    # tiled path, fori_loop chunk accumulation + >=2 row tiles
    check(2, 8, 48, 48, force_tiled=True, tag="tiled-loop")

    print("KERNEL_OK")
</pallas_src>

<mosaic_0001>
module attributes {stable_mosaic.version = 11 : i64} {
  func.func @kernel(%arg0: memref<2x4x256xf32, #tpu.memory_space<vmem>>, %arg1: memref<1x4x1xf32, #tpu.memory_space<vmem>>, %arg2: memref<1x4x1xf32, #tpu.memory_space<vmem>>, %arg3: memref<2x4x256xf32, #tpu.memory_space<vmem>>, %arg4: memref<1x4x1xf32, #tpu.memory_space<vmem>>, %arg5: memref<1x4x1xf32, #tpu.memory_space<vmem>>) attributes {dimension_semantics = [], scalar_prefetch = 0 : i64, scratch_operands = 0 : i64, tpu.core_type = #tpu.core_type<tc>} {
    %c0 = arith.constant 0 : index
    %c0_0 = arith.constant 0 : index
    %c0_1 = arith.constant 0 : index
    %0 = vector.load %arg0[%c0, %c0_0, %c0_1] : memref<2x4x256xf32, #tpu.memory_space<vmem>>, vector<2x4x256xf32>
    %cst = arith.constant dense<0.000000e+00> : vector<2x4xf32>
    %1 = vector.multi_reduction <add>, %0, %cst [2] : vector<2x4x256xf32> to vector<2x4xf32>
    %2 = vector.shape_cast %1 : vector<2x4xf32> to vector<2x4x1xf32>
    %cst_2 = arith.constant dense<0.000000e+00> : vector<4x1xf32>
    %3 = vector.multi_reduction <add>, %2, %cst_2 [0] : vector<2x4x1xf32> to vector<4x1xf32>
    %4 = vector.shape_cast %3 : vector<4x1xf32> to vector<1x4x1xf32>
    %cst_3 = arith.constant 0.001953125 : f32
    %5 = vector.broadcast %cst_3 : f32 to vector<1x4x1xf32>
    %6 = arith.mulf %4, %5 : vector<1x4x1xf32>
    %7 = vector.broadcast %6 : vector<1x4x1xf32> to vector<2x4x256xf32>
    %8 = arith.subf %0, %7 : vector<2x4x256xf32>
    %9 = arith.mulf %8, %8 : vector<2x4x256xf32>
    %cst_4 = arith.constant dense<0.000000e+00> : vector<2x4xf32>
    %10 = vector.multi_reduction <add>, %9, %cst_4 [2] : vector<2x4x256xf32> to vector<2x4xf32>
    %11 = vector.shape_cast %10 : vector<2x4xf32> to vector<2x4x1xf32>
    %cst_5 = arith.constant dense<0.000000e+00> : vector<4x1xf32>
    %12 = vector.multi_reduction <add>, %11, %cst_5 [0] : vector<2x4x1xf32> to vector<4x1xf32>
    %13 = vector.shape_cast %12 : vector<4x1xf32> to vector<1x4x1xf32>
    %cst_6 = arith.constant 0.00195694715 : f32
    %14 = vector.broadcast %cst_6 : f32 to vector<1x4x1xf32>
    %15 = arith.mulf %13, %14 : vector<1x4x1xf32>
    %cst_7 = arith.constant 9.99999974E-6 : f32
    %16 = vector.broadcast %cst_7 : f32 to vector<1x4x1xf32>
    %17 = arith.addf %15, %16 : vector<1x4x1xf32>
    %18 = math.rsqrt %17 : vector<1x4x1xf32>
    %c0_8 = arith.constant 0 : index
    %c0_9 = arith.constant 0 : index
    %c0_10 = arith.constant 0 : index
    %19 = vector.load %arg1[%c0_8, %c0_9, %c0_10] : memref<1x4x1xf32, #tpu.memory_space<vmem>>, vector<1x4x1xf32>
    %20 = arith.mulf %19, %18 : vector<1x4x1xf32>
    %c0_11 = arith.constant 0 : index
    %c0_12 = arith.constant 0 : index
    %c0_13 = arith.constant 0 : index
    %21 = vector.load %arg2[%c0_11, %c0_12, %c0_13] : memref<1x4x1xf32, #tpu.memory_space<vmem>>, vector<1x4x1xf32>
    %22 = arith.mulf %6, %20 : vector<1x4x1xf32>
    %23 = arith.subf %21, %22 : vector<1x4x1xf32>
    %24 = vector.broadcast %20 : vector<1x4x1xf32> to vector<2x4x256xf32>
    %25 = arith.mulf %0, %24 : vector<2x4x256xf32>
    %26 = vector.broadcast %23 : vector<1x4x1xf32> to vector<2x4x256xf32>
    %27 = arith.addf %25, %26 : vector<2x4x256xf32>
    %c0_14 = arith.constant 0 : index
    %c0_15 = arith.constant 0 : index
    %c0_16 = arith.constant 0 : index
    %28 = vector.load %arg3[%c0_14, %c0_15, %c0_16] : memref<2x4x256xf32, #tpu.memory_space<vmem>>, vector<2x4x256xf32>
    tpu.vector_store %arg3[%c0_14, %c0_15, %c0_16], %27 {strides = array<i32>} : memref<2x4x256xf32, #tpu.memory_space<vmem>>, vector<2x4x256xf32>,
    %c0_17 = arith.constant 0 : index
    %c0_18 = arith.constant 0 : index
    %c0_19 = arith.constant 0 : index
    %29 = vector.load %arg4[%c0_17, %c0_18, %c0_19] : memref<1x4x1xf32, #tpu.memory_space<vmem>>, vector<1x4x1xf32>
    tpu.vector_store %arg4[%c0_17, %c0_18, %c0_19], %6 {strides = array<i32>} : memref<1x4x1xf32, #tpu.memory_space<vmem>>, vector<1x4x1xf32>,
    %c0_20 = arith.constant 0 : index
    %c0_21 = arith.constant 0 : index
    %c0_22 = arith.constant 0 : index
    %30 = vector.load %arg5[%c0_20, %c0_21, %c0_22] : memref<1x4x1xf32, #tpu.memory_space<vmem>>, vector<1x4x1xf32>
    tpu.vector_store %arg5[%c0_20, %c0_21, %c0_22], %15 {strides = array<i32>} : memref<1x4x1xf32, #tpu.memory_space<vmem>>, vector<1x4x1xf32>,
    return
  }
}

</mosaic_0001>

<llo_original>
// kernel: tpu_custom_call.1
$region0: #{tpu_custom_call.1}
  #allocation0 [shape = 'u32[]', space=smem, size = 0x4, offset = 0x4, fixed_abs, tag = 'smem constant byte address 0x4 - core index']
  #allocation1 [shape = 'u32[144,128]{1,0:T(1,128)}', space=vmem, size = 0x12000, scoped, tag = 'internal scratch']
  %s0 = inlined_call_operand.hbm [shape: f32[2,4,256], index: 0, kind: input, shape index: {}]
  %s1 = inlined_call_operand.vmem [shape: f32[1,4,1], index: 1, kind: input, shape index: {}]
  %s2 = inlined_call_operand.vmem [shape: f32[1,4,1], index: 2, kind: input, shape index: {}]
  %s3 = inlined_call_operand.hbm [shape: f32[2,4,256], index: 3, kind: output, shape index: {0}]
  %s4 = inlined_call_operand.vmem [shape: f32[1,4,1], index: 4, kind: output, shape index: {1}]
  %s5 = inlined_call_operand.vmem [shape: f32[1,4,1], index: 5, kind: output, shape index: {2}]
  %6 = xla_tuple %s3, %s4, %s5
  %s7 = sld [smem:[#allocation0]]
  $region42: #{tpu_custom_call.1} parent=0
    _
  %s9 = ssub.s32 1, %s7
  %s10 = scalar_select 0, %s9, %s7
  $region1: #{tpu_custom_call.1} parent=0
    #allocation2 [shape = 'u8[8192]{0}', space=vmem, size = 0x2000, scoped, tag = 'input window, operand 0, single buffered']
    #allocation3 [shape = 's32[1]{0}', space=sflag, size = 0x4, scoped, tag = 'scoped memory for tpu_custom_call.1']
    #allocation4 [shape = 's32[1]{0}', space=sflag, size = 0x4, scoped, tag = 'scoped memory for tpu_custom_call.1']
    #allocation5 [shape = 'u8[8192]{0}', space=vmem, size = 0x2000, scoped, tag = 'output window, operand 0, single buffered']
    %11 = vsyncpa [#allocation3], 0
    %12 = vsyncpa [#allocation4], 0
    // Predicated region
    $region2: #{tpu_custom_call.1} parent=1 // pred_check
      _
    $region3: #{tpu_custom_call.1} parent=1 // pred_check_branch
      %14 = sbr.rel (0) target = $region5
    $region4: #{tpu_custom_call.1} parent=1 // pred_region
      %s16 = ssub.s32 256, 256
      %17 = vsyncadd [#allocation3], %s16
      %s18 = sshll.u32 [#allocation2], 4
      %s19 = int_to_ptr.vmem [resolvable:$true] %s18
      %24 = dma.hbm_to_vmem [thread:$0]  %s0, 256, %s19, [#allocation3], 128, 128, 8
    $region5: #{tpu_custom_call.1} parent=1 // pred_fallthru
      _
    // Predicated region
    $region6: #{tpu_custom_call.1} parent=1 // pred_check
      _
    $region7: #{tpu_custom_call.1} parent=1 // pred_check_branch
      %26 = sbr.rel (0) target = $region9
    $region8: #{tpu_custom_call.1} parent=1 // pred_region
      _
    $region9: #{tpu_custom_call.1} parent=1 // pred_fallthru
      _
    // Predicated region
    $region10: #{tpu_custom_call.1} parent=1 // pred_check
      _
    $region11: #{tpu_custom_call.1} parent=1 // pred_check_branch
      %28 = sbr.rel (0) target = $region13
    $region12: #{tpu_custom_call.1} parent=1 // pred_region
      _
    $region13: #{tpu_custom_call.1} parent=1 // pred_fallthru
      _
    // Predicated region
    $region14: #{tpu_custom_call.1} parent=1 // pred_check
      _
    $region15: #{tpu_custom_call.1} parent=1 // pred_check_branch
      %30 = sbr.rel (0) target = $region17
    $region16: #{tpu_custom_call.1} parent=1 // pred_region
      %31 = dma.done [#allocation3], 256
    $region17: #{tpu_custom_call.1} parent=1 // pred_fallthru
      _
    %v32 = vld [vmem:[#allocation2] sm:$0xff]
    %v33 = vld [vmem:[#allocation2 + $0x8] sm:$0xff]
    %v36 = vcombine.high %v32, %v32
    %v37 = vcombine.high %v33, %v33
    %vm40 = vcmask 1043456
    %v41 = vsel %vm40, %v32, 0.0
    %v42 = vsel %vm40, %v36, 0.0
    %v43 = vadd.f32 %v41, %v42
    %44 = vadd.xlane.f32.xlu0 %v43
    %v45 = vpop.xlane.xlu0 %44
    %v46 = vsel %vm40, %v33, 0.0
    %v47 = vsel %vm40, %v37, 0.0
    %v48 = vadd.f32 %v46, %v47
    %49 = vadd.xlane.f32.xlu0 %v48
    %v50 = vpop.xlane.xlu0 %49
    %v51 = vsel %vm40, %v45, 0.0
    %v52 = vsel %vm40, %v50, 0.0
    %v53 = vadd.f32 %v51, %v52
    %v54 = vmul.f32 %v53, 0.001953125
    %v57 = vunpack.c.l.s4 839922192
    %v58 = vunpack.c.0.s8 %v57
    %v59 = vlaneseq
    %v60 = vshrl.u32 %v59, 7
    %v61 = vsub.s32 %v58, %v60
    %v62 = vrot.slane %v54, %v61
    %v64 = vsub.f32 %v32, %v62
    %v65 = vsub.f32 %v33, %v62
    %v66 = vmul.f32 %v64, %v64
    %v67 = vmul.f32 %v65, %v65
    %v70 = vcombine.high %v66, %v66
    %v71 = vcombine.high %v67, %v67
    %v74 = vsel %vm40, %v66, 0.0
    %v75 = vsel %vm40, %v70, 0.0
    %v76 = vadd.f32 %v74, %v75
    %77 = vadd.xlane.f32.xlu0 %v76
    %v78 = vpop.xlane.xlu0 %77
    %v79 = vsel %vm40, %v67, 0.0
    %v80 = vsel %vm40, %v71, 0.0
    %v81 = vadd.f32 %v79, %v80
    %82 = vadd.xlane.f32.xlu0 %v81
    %v83 = vpop.xlane.xlu0 %82
    %v84 = vsel %vm40, %v78, 0.0
    %v85 = vsel %vm40, %v83, 0.0
    %v86 = vadd.f32 %v84, %v85
    %v87 = vmul.f32 %v86, 0.0019569471
    %v88 = vadd.f32 %v87, 1e-05
    %v89 = vrsqrt.pop %v88
    %v90 = vld [vmem:[%s1] sm:$0xf]
    %v91 = vmul.f32 %v90, %v89
    %v92 = vld [vmem:[%s2] sm:$0xf]
    %v93 = vmul.f32 %v54, %v91
    %v94 = vsub.f32 %v92, %v93
    %96 = vset.pattern.permute.xlu0 0
    %97 = vperm.xlu0 %96, %v91
    %v98 = vpop.permute.xlu0 %97
    %v100 = vunpack.c.l.s4 839922192
    %v101 = vunpack.c.0.s8 %v100
    %v102 = vlaneseq
    %v103 = vshrl.u32 %v102, 7
    %v104 = vsub.s32 %v101, %v103
    %v105 = vrot.slane %v98, %v104
    %v107 = vmul.f32 %v32, %v105
    %v108 = vmul.f32 %v33, %v105
    %110 = vset.pattern.permute.xlu0 0
    %111 = vperm.xlu0 %110, %v94
    %v112 = vpop.permute.xlu0 %111
    %v114 = vunpack.c.l.s4 839922192
    %v115 = vunpack.c.0.s8 %v114
    %v116 = vlaneseq
    %v117 = vshrl.u32 %v116, 7
    %v118 = vsub.s32 %v115, %v117
    %v119 = vrot.slane %v112, %v118
    %v121 = vadd.f32 %v107, %v119
    %v122 = vadd.f32 %v108, %v119
    %123 = vst [vmem:[#allocation5] sm:$0xff] %v121
    %124 = vst [vmem:[#allocation5 + $0x8] sm:$0xff] %v122
    %vm125 = vcmask 3072
    %126 = vst.msk [vmem:[%s4] sm:$0xf] %vm125, %v54
    %127 = vst.msk [vmem:[%s5] sm:$0xf] %vm125, %v87
    // Predicated region
    $region18: #{tpu_custom_call.1} parent=1 // pred_check
      _
    $region19: #{tpu_custom_call.1} parent=1 // pred_check_branch
      %129 = sbr.rel (0) target = $region21
    $region20: #{tpu_custom_call.1} parent=1 // pred_region
      %s131 = ssub.s32 256, 256
      %132 = vsyncadd [#allocation4], %s131
      %s133 = sshll.u32 [#allocation5], 4
      %s134 = int_to_ptr.vmem [resolvable:$true] %s133
      %139 = dma.vmem_to_hbm [thread:$0]  %s134, 256, %s3, [#allocation4], 128, 128, 8
    $region21: #{tpu_custom_call.1} parent=1 // pred_fallthru
      _
    // Predicated region
    $region22: #{tpu_custom_call.1} parent=1 // pred_check
      _
    $region23: #{tpu_custom_call.1} parent=1 // pred_check_branch
      %141 = sbr.rel (0) target = $region25
    $region24: #{tpu_custom_call.1} parent=1 // pred_region
      _
    $region25: #{tpu_custom_call.1} parent=1 // pred_fallthru
      _
    // Predicated region
    $region26: #{tpu_custom_call.1} parent=1 // pred_check
      _
    $region27: #{tpu_custom_call.1} parent=1 // pred_check_branch
      %143 = sbr.rel (0) target = $region29
    $region28: #{tpu_custom_call.1} parent=1 // pred_region
      _
    $region29: #{tpu_custom_call.1} parent=1 // pred_fallthru
      _
    // Predicated region
    $region30: #{tpu_custom_call.1} parent=1 // pred_check
      _
    $region31: #{tpu_custom_call.1} parent=1 // pred_check_branch
      %145 = sbr.rel (0) target = $region33
    $region32: #{tpu_custom_call.1} parent=1 // pred_region
      %146 = dma.done [#allocation4], 256
    $region33: #{tpu_custom_call.1} parent=1 // pred_fallthru
      _
    // Predicated region
    $region34: #{tpu_custom_call.1} parent=1 // pred_check
      _
    $region35: #{tpu_custom_call.1} parent=1 // pred_check_branch
      %148 = sbr.rel (0) target = $region37
    $region36: #{tpu_custom_call.1} parent=1 // pred_region
      _
    $region37: #{tpu_custom_call.1} parent=1 // pred_fallthru
      _
    // Predicated region
    $region38: #{tpu_custom_call.1} parent=1 // pred_check
      _
    $region39: #{tpu_custom_call.1} parent=1 // pred_check_branch
      %150 = sbr.rel (0) target = $region41
    $region40: #{tpu_custom_call.1} parent=1 // pred_region
      _
    $region41: #{tpu_custom_call.1} parent=1 // pred_fallthru
      _
    %151 = vsyncpa [#allocation3], 1
    %152 = vsyncpa [#allocation4], 1

</llo_original>
